<compile_context>
chip_gen: v6e
topology: v6e:2x2x1
jax: 0.10.0
libtpu: 0.0.40
codegen_flags: <defaults>
</compile_context>

<pallas_src>
import math
import functools
import inspect

import jax
import jax.numpy as jnp
from jax.experimental import pallas as pl
from jax.experimental.pallas import tpu as pltpu


# ----------------------------------------------------------------------------
# small helpers
# ----------------------------------------------------------------------------
def _round_up(x, m):
    return ((x + m - 1) // m) * m


def _cdiv(a, b):
    return (a + b - 1) // b


def _blockspec_supports_pipeline_mode():
    if not hasattr(pl, "Buffered"):
        return False
    try:
        return "pipeline_mode" in inspect.signature(pl.BlockSpec).parameters
    except (TypeError, ValueError):
        # Can't introspect; we'll still try and rely on the runtime fallback.
        return True


_HAS_PIPELINE_MODE = _blockspec_supports_pipeline_mode()


def _vmem_caps():
    """Generation-aware (budget, vmem_limit) in bytes."""
    try:
        cap = int(pltpu.get_tpu_info().vmem_capacity_bytes)
    except Exception:
        cap = 64 * 1024 * 1024  # conservative: safe on every generation
    budget = min(int(cap * 0.70), cap - 12 * 1024 * 1024)
    limit = min(int(cap * 0.85), cap - 8 * 1024 * 1024)
    budget = max(budget, 16 * 1024 * 1024)
    limit = max(limit, budget + 4 * 1024 * 1024)
    return budget, limit


# ----------------------------------------------------------------------------
# kernel
# ----------------------------------------------------------------------------
def _random_layer_kernel(*refs, n, scale):
    # refs = (x_0, ..., x_{n-1}, w_0, ..., w_{n-1}, o)
    x_refs = refs[:n]
    w_refs = refs[n:2 * n]
    o_ref = refs[2 * n]

    w0 = w_refs[0][...]
    acc = jnp.dot(x_refs[0][...].astype(w0.dtype), w0,
                  preferred_element_type=jnp.float32)
    for i in range(1, n):
        wi = w_refs[i][...]
        acc = acc * jnp.dot(x_refs[i][...].astype(wi.dtype), wi,
                            preferred_element_type=jnp.float32)
    # Fold the 1/output_dim^(1/n) scale into the final store.
    o_ref[...] = (acc * scale).astype(o_ref.dtype)


# ----------------------------------------------------------------------------
# tiling
# ----------------------------------------------------------------------------
def _select_tiles(B8, D128, d_list, x_isize, w_isize, out_isize, budget,
                  w_bufs, prefer_two_steps=True):
    def footprint(tm, tn):
        xs = sum(2 * _round_up(tm, 8) * _round_up(d, 128) * x_isize
                 for d in d_list)                               # double-buffered
        ws = sum(w_bufs * _round_up(d, 8) * tn * w_isize for d in d_list)
        out = 2 * _round_up(tm, 8) * tn * out_isize             # double-buffered
        inter = 2 * _round_up(tm, 8) * tn * 4                   # acc + one dot
        return xs + ws + out + inter + (1 << 20)                # ~1 MiB slack

    tn = D128                                  # full width: weights resident
    tm = min(1024, B8)                         # grow batch tile up to budget
    while tm > 8 and footprint(tm, tn) > budget:
        tm = max(8, _round_up(tm // 2, 8))
    while tn > 128 and footprint(tm, tn) > budget:
        tn = max(128, _round_up(tn // 2, 128))

    if prefer_two_steps:
        # v7x has 2 TensorCores; make sure a "parallel" axis has >= 2 steps.
        if _cdiv(B8, tm) * _cdiv(D128, tn) < 2:
            if B8 >= 16:
                tm = max(8, _round_up(_cdiv(B8, 2), 8))
            elif D128 >= 256:
                tn = max(128, _round_up(_cdiv(D128, 2), 128))
    return tm, tn


# ----------------------------------------------------------------------------
# launcher (expects weights already padded to a 128-multiple of columns)
# ----------------------------------------------------------------------------
def _random_layer_call(input_list, padded_matrices, *, output_dim, scale,
                       output_dtype=jnp.float32, single_buffer_weights=True):
    n = len(input_list)
    assert n == len(padded_matrices) and n >= 1
    B = input_list[0].shape[0]
    D128 = padded_matrices[0].shape[1]
    d_list = [w.shape[0] for w in padded_matrices]
    for x, w in zip(input_list, padded_matrices):
        assert x.shape[0] == B and x.shape[1] == w.shape[0] and w.shape[1] == D128

    # Only the (cheap, tiny-feature) inputs ever get a per-call pad.
    B8 = _round_up(B, 8)
    xs = [jnp.pad(x, ((0, B8 - B), (0, 0))) if B8 != B else x
          for x in input_list]

    x_isize = jnp.dtype(xs[0].dtype).itemsize
    w_isize = jnp.dtype(padded_matrices[0].dtype).itemsize
    out_isize = jnp.dtype(output_dtype).itemsize

    budget, vmem_limit = _vmem_caps()
    use_buffered = bool(single_buffer_weights and _HAS_PIPELINE_MODE)
    w_bufs = 1 if use_buffered else 2
    tm, tn = _select_tiles(B8, D128, d_list, x_isize, w_isize, out_isize,
                           budget, w_bufs)

    # Grid = (col_tiles, batch_tiles): batch is the fastest axis, so each
    # (d_i, tn) weight slab is fetched once per column tile and stays VMEM-
    # resident while all batch tiles stream through.
    grid = (_cdiv(D128, tn), _cdiv(B8, tm))

    kernel = functools.partial(_random_layer_kernel, n=n, scale=scale)

    def launch(buffered_weights):
        in_specs = [pl.BlockSpec((tm, d), lambda j, i: (i, 0)) for d in d_list]
        if buffered_weights:
            # Weight blocks are constant along the fast batch axis: a single
            # buffer suffices and halves their VMEM footprint.
            in_specs += [
                pl.BlockSpec((d, tn), lambda j, i: (0, j),
                             pipeline_mode=pl.Buffered(1))
                for d in d_list
            ]
        else:
            in_specs += [pl.BlockSpec((d, tn), lambda j, i: (0, j))
                         for d in d_list]
        out_spec = pl.BlockSpec((tm, tn), lambda j, i: (i, j))

        return pl.pallas_call(
            kernel,
            out_shape=jax.ShapeDtypeStruct((B8, D128), output_dtype),
            grid_spec=pltpu.PrefetchScalarGridSpec(
                num_scalar_prefetch=0,
                grid=grid,
                in_specs=in_specs,
                out_specs=out_spec,
            ),
            compiler_params=pltpu.CompilerParams(
                dimension_semantics=("parallel", "parallel"),
                vmem_limit_bytes=int(vmem_limit),
            ),
        )(*xs, *padded_matrices)

    if use_buffered:
        try:
            out = launch(True)
        except Exception:
            # pipeline_mode / Buffered(1) not supported on this jax version:
            # fall back to default double-buffering (correctness unaffected).
            out = launch(False)
    else:
        out = launch(False)

    if B8 != B or D128 != output_dim:
        out = out[:B, :output_dim]
    return out


# ----------------------------------------------------------------------------
# module-equivalent wrapper
# ----------------------------------------------------------------------------
class RandomLayerPallas:
    """JAX/Pallas equivalent of the PyTorch RandomLayer module."""

    def __init__(self, input_dim_list, output_dim=1024, *, key=None,
                 param_dtype=jnp.float32, output_dtype=jnp.float32):
        self.input_num = len(input_dim_list)
        self.output_dim = output_dim
        self.output_dtype = output_dtype
        if key is None:
            key = jax.random.PRNGKey(0)
        keys = jax.random.split(key, self.input_num)
        # torch.randn(input_dim, output_dim) equivalents (kept in f32).
        self.random_matrix = [
            jax.random.normal(keys[i], (input_dim_list[i], output_dim),
                              dtype=jnp.float32)
            for i in range(self.input_num)
        ]
        # One-time lane-dim padding + persistent storage dtype (the matrices
        # are static, so this never shows up in per-forward HBM traffic).
        D128 = _round_up(output_dim, 128)
        padded = []
        for w in self.random_matrix:
            if D128 != output_dim:
                w = jnp.pad(w, ((0, 0), (0, D128 - output_dim)))
            padded.append(w.astype(param_dtype))
        self._padded_matrix = padded
        self._scale = 1.0 / math.pow(float(output_dim), 1.0 / self.input_num)
        # TODO(synk): the PyTorch .cuda() device-placement helper has no JAX
        # equivalent here; arrays live on the default (TPU) device already.

    def __call__(self, input_list):
        return self.forward(input_list)

    def forward(self, input_list):
        assert len(input_list) == self.input_num
        return _random_layer_call(
            input_list, self._padded_matrix,
            output_dim=self.output_dim, scale=self._scale,
            output_dtype=self.output_dtype)


def random_layer_reference(input_list, random_matrices):
    n = len(input_list)
    ys = [x @ w for x, w in zip(input_list, random_matrices)]
    out = ys[0] / math.pow(float(random_matrices[0].shape[1]), 1.0 / n)
    for y in ys[1:]:
        out = out * y
    return out


# ----------------------------------------------------------------------------
# self-test
# ----------------------------------------------------------------------------
if __name__ == "__main__":
    key = jax.random.PRNGKey(0)
    k_layer, k0, k1, k2, k3, k4 = jax.random.split(key, 6)

    # --- case 1: tile-aligned shapes (2 inputs: features + logits) ----------
    B, dims, D = 8, [32, 16], 256
    layer = RandomLayerPallas(dims, D, key=k_layer)
    x0 = jax.random.normal(k0, (B, dims[0]), dtype=jnp.float32)
    x1 = jax.random.normal(k1, (B, dims[1]), dtype=jnp.float32)
    out = jax.block_until_ready(layer([x0, x1]))
    ref = random_layer_reference([x0, x1], layer.random_matrix)
    assert out.shape == (B, D)
    assert jnp.allclose(out, ref, rtol=1e-4, atol=1e-4), "mismatch (case 1)"

    # --- case 2: non-aligned B and output_dim (padding / slicing path) ------
    B2, dims2, D2 = 10, [33, 7], 200
    layer2 = RandomLayerPallas(dims2, D2, key=k2)
    x2 = jax.random.normal(k3, (B2, dims2[0]), dtype=jnp.float32)
    x3 = jax.random.normal(k4, (B2, dims2[1]), dtype=jnp.float32)
    out2 = jax.block_until_ready(layer2([x2, x3]))
    ref2 = random_layer_reference([x2, x3], layer2.random_matrix)
    assert out2.shape == (B2, D2)
    assert jnp.allclose(out2, ref2, rtol=1e-4, atol=1e-4), "mismatch (case 2)"

    # --- case 3: production-style low-precision path (bf16 weights/output) --
    layer3 = RandomLayerPallas(dims, D, key=k_layer,
                               param_dtype=jnp.bfloat16,
                               output_dtype=jnp.bfloat16)
    out3 = jax.block_until_ready(layer3([x0, x1]))
    assert out3.shape == (B, D) and out3.dtype == jnp.bfloat16
    assert jnp.allclose(out3.astype(jnp.float32), ref, rtol=1e-1, atol=2.5e-1), \
        "mismatch (case 3, bf16)"

    print("KERNEL_OK")
</pallas_src>

<mosaic_0001>
module attributes {stable_mosaic.version = 11 : i64} {
  func.func @_random_layer_kernel(%arg0: i32, %arg1: i32, %arg2: memref<8x32xf32, #tpu.memory_space<vmem>>, %arg3: memref<8x16xf32, #tpu.memory_space<vmem>>, %arg4: memref<32x128xf32, #tpu.memory_space<vmem>>, %arg5: memref<16x128xf32, #tpu.memory_space<vmem>>, %arg6: memref<8x128xf32, #tpu.memory_space<vmem>>) attributes {dimension_semantics = [#tpu.dimension_semantics<parallel>, #tpu.dimension_semantics<parallel>], iteration_bounds = array<i64: 2, 1>, scalar_prefetch = 0 : i64, scratch_operands = 0 : i64, tpu.core_type = #tpu.core_type<tc>, window_params = [{transform_indices = @transform_0, window_bounds = array<i64: 8, 32>}, {transform_indices = @transform_1, window_bounds = array<i64: 8, 16>}, {pipeline_mode = #tpu.pipeline_mode<synchronous>, transform_indices = @transform_2, window_bounds = array<i64: 32, 128>}, {pipeline_mode = #tpu.pipeline_mode<synchronous>, transform_indices = @transform_3, window_bounds = array<i64: 16, 128>}, {transform_indices = @transform_4, window_bounds = array<i64: 8, 128>}]} {
    %c0 = arith.constant 0 : index
    %c0_0 = arith.constant 0 : index
    %0 = vector.load %arg4[%c0, %c0_0] : memref<32x128xf32, #tpu.memory_space<vmem>>, vector<32x128xf32>
    %c0_1 = arith.constant 0 : index
    %c0_2 = arith.constant 0 : index
    %1 = vector.load %arg2[%c0_1, %c0_2] : memref<8x32xf32, #tpu.memory_space<vmem>>, vector<8x32xf32>
    %cst = arith.constant dense<0.000000e+00> : vector<8x128xf32>
    %2 = tpu.matmul %1, %0, %cst {dimension_numbers = #tpu.dot_dimension_numbers<[1], [0], [0], [1], [0, 0, 1, 1], [], []>} : vector<8x32xf32>, vector<32x128xf32>, vector<8x128xf32> -> vector<8x128xf32>
    %c0_3 = arith.constant 0 : index
    %c0_4 = arith.constant 0 : index
    %3 = vector.load %arg5[%c0_3, %c0_4] : memref<16x128xf32, #tpu.memory_space<vmem>>, vector<16x128xf32>
    %c0_5 = arith.constant 0 : index
    %c0_6 = arith.constant 0 : index
    %4 = vector.load %arg3[%c0_5, %c0_6] : memref<8x16xf32, #tpu.memory_space<vmem>>, vector<8x16xf32>
    %cst_7 = arith.constant dense<0.000000e+00> : vector<8x128xf32>
    %5 = tpu.matmul %4, %3, %cst_7 {dimension_numbers = #tpu.dot_dimension_numbers<[1], [0], [0], [1], [0, 0, 1, 1], [], []>} : vector<8x16xf32>, vector<16x128xf32>, vector<8x128xf32> -> vector<8x128xf32>
    %6 = arith.mulf %2, %5 : vector<8x128xf32>
    %cst_8 = arith.constant 6.250000e-02 : f32
    %7 = vector.broadcast %cst_8 : f32 to vector<8x128xf32>
    %8 = arith.mulf %6, %7 : vector<8x128xf32>
    %c0_9 = arith.constant 0 : index
    %c0_10 = arith.constant 0 : index
    %9 = vector.load %arg6[%c0_9, %c0_10] : memref<8x128xf32, #tpu.memory_space<vmem>>, vector<8x128xf32>
    tpu.vector_store %arg6[%c0_9, %c0_10], %8 {strides = array<i32>} : memref<8x128xf32, #tpu.memory_space<vmem>>, vector<8x128xf32>,
    return
  }
  func.func @transform_0(%arg0: i32, %arg1: i32) -> (i32, i32) {
    %c0_i32 = arith.constant 0 : i32
    %c0_i32_0 = arith.constant 0 : i32
    return %arg1, %c0_i32 : i32, i32
  }
  func.func @transform_1(%arg0: i32, %arg1: i32) -> (i32, i32) {
    %c0_i32 = arith.constant 0 : i32
    %c0_i32_0 = arith.constant 0 : i32
    return %arg1, %c0_i32 : i32, i32
  }
  func.func @transform_2(%arg0: i32, %arg1: i32) -> (i32, i32) {
    %c0_i32 = arith.constant 0 : i32
    %c0_i32_0 = arith.constant 0 : i32
    return %c0_i32, %arg0 : i32, i32
  }
  func.func @transform_3(%arg0: i32, %arg1: i32) -> (i32, i32) {
    %c0_i32 = arith.constant 0 : i32
    %c0_i32_0 = arith.constant 0 : i32
    return %c0_i32, %arg0 : i32, i32
  }
  func.func @transform_4(%arg0: i32, %arg1: i32) -> (i32, i32) {
    %c0_i32 = arith.constant 0 : i32
    return %arg1, %arg0 : i32, i32
  }
}

module attributes {stable_mosaic.version = 11 : i64} {
  func.func @_random_layer_kernel(%arg0: i32, %arg1: i32, %arg2: memref<8x32xf32, #tpu.memory_space<vmem>>, %arg3: memref<8x16xf32, #tpu.memory_space<vmem>>, %arg4: memref<32x128xf32, #tpu.memory_space<vmem>>, %arg5: memref<16x128xf32, #tpu.memory_space<vmem>>, %arg6: memref<8x128xf32, #tpu.memory_space<vmem>>) attributes {dimension_semantics = [#tpu.dimension_semantics<parallel>, #tpu.dimension_semantics<parallel>], iteration_bounds = array<i64: 2, 1>, scalar_prefetch = 0 : i64, scratch_operands = 0 : i64, tpu.core_type = #tpu.core_type<tc>, window_params = [{transform_indices = @transform_0, window_bounds = array<i64: 8, 32>}, {transform_indices = @transform_1, window_bounds = array<i64: 8, 16>}, {transform_indices = @transform_2, window_bounds = array<i64: 32, 128>}, {transform_indices = @transform_3, window_bounds = array<i64: 16, 128>}, {transform_indices = @transform_4, window_bounds = array<i64: 8, 128>}]} {
    %c0 = arith.constant 0 : index
    %c0_0 = arith.constant 0 : index
    %0 = vector.load %arg4[%c0, %c0_0] : memref<32x128xf32, #tpu.memory_space<vmem>>, vector<32x128xf32>
    %c0_1 = arith.constant 0 : index
    %c0_2 = arith.constant 0 : index
    %1 = vector.load %arg2[%c0_1, %c0_2] : memref<8x32xf32, #tpu.memory_space<vmem>>, vector<8x32xf32>
    %cst = arith.constant dense<0.000000e+00> : vector<8x128xf32>
    %2 = tpu.matmul %1, %0, %cst {dimension_numbers = #tpu.dot_dimension_numbers<[1], [0], [0], [1], [0, 0, 1, 1], [], []>} : vector<8x32xf32>, vector<32x128xf32>, vector<8x128xf32> -> vector<8x128xf32>
    %c0_3 = arith.constant 0 : index
    %c0_4 = arith.constant 0 : index
    %3 = vector.load %arg5[%c0_3, %c0_4] : memref<16x128xf32, #tpu.memory_space<vmem>>, vector<16x128xf32>
    %c0_5 = arith.constant 0 : index
    %c0_6 = arith.constant 0 : index
    %4 = vector.load %arg3[%c0_5, %c0_6] : memref<8x16xf32, #tpu.memory_space<vmem>>, vector<8x16xf32>
    %cst_7 = arith.constant dense<0.000000e+00> : vector<8x128xf32>
    %5 = tpu.matmul %4, %3, %cst_7 {dimension_numbers = #tpu.dot_dimension_numbers<[1], [0], [0], [1], [0, 0, 1, 1], [], []>} : vector<8x16xf32>, vector<16x128xf32>, vector<8x128xf32> -> vector<8x128xf32>
    %6 = arith.mulf %2, %5 : vector<8x128xf32>
    %cst_8 = arith.constant 6.250000e-02 : f32
    %7 = vector.broadcast %cst_8 : f32 to vector<8x128xf32>
    %8 = arith.mulf %6, %7 : vector<8x128xf32>
    %c0_9 = arith.constant 0 : index
    %c0_10 = arith.constant 0 : index
    %9 = vector.load %arg6[%c0_9, %c0_10] : memref<8x128xf32, #tpu.memory_space<vmem>>, vector<8x128xf32>
    tpu.vector_store %arg6[%c0_9, %c0_10], %8 {strides = array<i32>} : memref<8x128xf32, #tpu.memory_space<vmem>>, vector<8x128xf32>,
    return
  }
  func.func @transform_0(%arg0: i32, %arg1: i32) -> (i32, i32) {
    %c0_i32 = arith.constant 0 : i32
    %c0_i32_0 = arith.constant 0 : i32
    return %arg1, %c0_i32 : i32, i32
  }
  func.func @transform_1(%arg0: i32, %arg1: i32) -> (i32, i32) {
    %c0_i32 = arith.constant 0 : i32
    %c0_i32_0 = arith.constant 0 : i32
    return %arg1, %c0_i32 : i32, i32
  }
  func.func @transform_2(%arg0: i32, %arg1: i32) -> (i32, i32) {
    %c0_i32 = arith.constant 0 : i32
    %c0_i32_0 = arith.constant 0 : i32
    return %c0_i32, %arg0 : i32, i32
  }
  func.func @transform_3(%arg0: i32, %arg1: i32) -> (i32, i32) {
    %c0_i32 = arith.constant 0 : i32
    %c0_i32_0 = arith.constant 0 : i32
    return %c0_i32, %arg0 : i32, i32
  }
  func.func @transform_4(%arg0: i32, %arg1: i32) -> (i32, i32) {
    %c0_i32 = arith.constant 0 : i32
    return %arg1, %arg0 : i32, i32
  }
}

</mosaic_0001>

<llo_original>
// kernel: tpu_custom_call.1
$region0: #{tpu_custom_call.1}
  #allocation0 [shape = 'u32[]', space=smem, size = 0x4, offset = 0x4, fixed_abs, tag = 'smem constant byte address 0x4 - core index']
  #allocation1 [shape = 'u32[144,128]{1,0:T(1,128)}', space=vmem, size = 0x12000, scoped, tag = 'internal scratch']
  %s0 = inlined_call_operand.hbm [shape: f32[8,32], index: 0, kind: input, shape index: {}]
  %s1 = inlined_call_operand.hbm [shape: f32[8,16], index: 1, kind: input, shape index: {}]
  %s2 = inlined_call_operand.hbm [shape: f32[32,256], index: 2, kind: input, shape index: {}]
  %s3 = inlined_call_operand.hbm [shape: f32[16,256], index: 3, kind: input, shape index: {}]
  %s4 = inlined_call_operand.hbm [shape: f32[8,256], index: 4, kind: output, shape index: {}]
  %s5 = sld [smem:[#allocation0]]
  $region65: #{tpu_custom_call.1} parent=0
    _
  %s7 = ssub.s32 1, %s5
  %s8 = scalar_select 0, %s7, %s5
  $region1: #{tpu_custom_call.1} parent=0
    #allocation2 [shape = 'u8[4096]{0}', space=vmem, size = 0x1000, scoped, tag = 'input window, operand 0, single buffered']
    #allocation3 [shape = 's32[2]{0}', space=sflag, size = 0x8, scoped, tag = 'scoped memory for tpu_custom_call.1']
    #allocation4 [shape = 's32[2]{0}', space=sflag, size = 0x8, scoped, tag = 'scoped memory for tpu_custom_call.1']
    #allocation5 [shape = 'u8[4096]{0}', space=vmem, size = 0x1000, scoped, tag = 'input window, operand 1, single buffered']
    #allocation6 [shape = 's32[1]{0}', space=sflag, size = 0x4, scoped, tag = 'scoped memory for tpu_custom_call.1']
    #allocation7 [shape = 'u8[16384]{0}', space=vmem, size = 0x4000, scoped, tag = 'input window, operand 2, single buffered']
    #allocation8 [shape = 'u8[8192]{0}', space=vmem, size = 0x2000, scoped, tag = 'input window, operand 3, single buffered']
    #allocation9 [shape = 's32[1]{0}', space=sflag, size = 0x4, scoped, tag = 'scoped memory for tpu_custom_call.1']
    #allocation10 [shape = 'u8[8192]{0}', space=vmem, size = 0x2000, scoped, tag = 'output window, operand 0']
    %9 = vsyncpa [#allocation3], 0
    %10 = vsyncpa [#allocation6], 0
    %11 = vsyncpa [#allocation9], 0
    %12 = vsyncpa [#allocation4], 0
    %s13 = scalar_lea.sflag [#allocation4], 1
    %14 = vsyncpa %s13, 0
    loop: start=0, step=1, limit=4
    $region2: #{tpu_custom_call.1} parent=1 // loop_pre_header
      _
    $region3: #{tpu_custom_call.1} parent=1 // loop_header
      %s16 = sphi 0, %s20
      %p17 = scmp.ge.s32.totalorder %s16, 4
      %s23 = sphi 0, %s35
      %s24 = sphi 0, %s31
      %s25 = sphi 0, %s23
      %s26 = sphi 0, %s24
      %s27 = sphi 0, %s25
      %s28 = sphi 0, %s26
      %s38 = sphi 0, %s40
      %s41 = sphi 0, %s38
      %s42 = sphi 0, %s41
      %s58 = sphi 0, %s42
      %s64 = sphi 0, %s66
      %s67 = sphi 0, %s64
      %s68 = sphi 0, %s67
      %s84 = sphi 0, %s68
      %s90 = sphi 0, %s92
      %s93 = sphi 0, %s90
      %s94 = sphi 0, %s93
      %s110 = sphi 0, %s94
      %s116 = sphi 0, %s118
      %s119 = sphi 0, %s116
      %s120 = sphi 0, %s119
      %s136 = sphi 0, %s120
      %s144 = sphi 0, %s146
      %s147 = sphi 0, %s144
      %s148 = sphi 0, %s147
      %s164 = sphi 0, %s148
    $region4: #{tpu_custom_call.1} parent=1 // loop_header_branch
      %19 = sbr.rel (%p17) target = $region8
    $region5: #{tpu_custom_call.1} parent=1 // loop_body
      %s21 = ssub.s32 %s16, 1
      %s22 = ssub.s32 %s16, 2
      %s29 = sadd.s32 1, %s24
      %p30 = scmp.ge.s32.totalorder %s29, 1
      %s31 = scalar_select %p30, 0, %s29
      %s32 = sadd.s32 1, %s23
      %s33 = scalar_select %p30, %s32, %s23
      %p34 = scmp.ge.s32.totalorder %s33, 2
      %s35 = scalar_select %p34, 0, %s33
      %s36 = ssub.s32 %s24, %s31
      %p37 = scmp.eq.s32.totalorder %s36, 0
      %s39 = sadd.s32 %s38, 1
      %s40 = scalar_select %p37, %s38, %s39
      %p43 = pneg %p37
      %p44 = scmp.eq.s32.totalorder %s16, 1
      %p45 = por %p43, %p44
      %p46 = scmp.ne.s32.totalorder %s38, %s41
      %p47 = scmp.eq.s32.totalorder %s16, 0
      %p48 = por %p46, %p47
      %p49 = scmp.ne.s32.totalorder %s38, %s41
      %p50 = scmp.eq.s32.totalorder %s21, 1
      %p51 = por %p49, %p50
      %p52 = scmp.ne.s32.totalorder %s41, %s42
      %p53 = scmp.eq.s32.totalorder %s21, 0
      %p54 = por %p52, %p53
      %p55 = scmp.ne.s32.totalorder %s41, %s42
      %p56 = scmp.eq.s32.totalorder %s22, 1
      %p57 = por %p55, %p56
      %p59 = scmp.ne.s32.totalorder %s42, %s58
      %p60 = scmp.eq.s32.totalorder %s22, 0
      %p61 = por %p59, %p60
      %s62 = ssub.s32 %s24, %s31
      %p63 = scmp.eq.s32.totalorder %s62, 0
      %s65 = sadd.s32 %s64, 1
      %s66 = scalar_select %p63, %s64, %s65
      %p69 = pneg %p63
      %p70 = scmp.eq.s32.totalorder %s16, 1
      %p71 = por %p69, %p70
      %p72 = scmp.ne.s32.totalorder %s64, %s67
      %p73 = scmp.eq.s32.totalorder %s16, 0
      %p74 = por %p72, %p73
      %p75 = scmp.ne.s32.totalorder %s64, %s67
      %p76 = scmp.eq.s32.totalorder %s21, 1
      %p77 = por %p75, %p76
      %p78 = scmp.ne.s32.totalorder %s67, %s68
      %p79 = scmp.eq.s32.totalorder %s21, 0
      %p80 = por %p78, %p79
      %p81 = scmp.ne.s32.totalorder %s67, %s68
      %p82 = scmp.eq.s32.totalorder %s22, 1
      %p83 = por %p81, %p82
      %p85 = scmp.ne.s32.totalorder %s68, %s84
      %p86 = scmp.eq.s32.totalorder %s22, 0
      %p87 = por %p85, %p86
      %s88 = ssub.s32 %s23, %s35
      %p89 = scmp.eq.s32.totalorder %s88, 0
      %s91 = sadd.s32 %s90, 1
      %s92 = scalar_select %p89, %s90, %s91
      %p95 = pneg %p89
      %p96 = scmp.eq.s32.totalorder %s16, 1
      %p97 = por %p95, %p96
      %p98 = scmp.ne.s32.totalorder %s90, %s93
      %p99 = scmp.eq.s32.totalorder %s16, 0
      %p100 = por %p98, %p99
      %p101 = scmp.ne.s32.totalorder %s90, %s93
      %p102 = scmp.eq.s32.totalorder %s21, 1
      %p103 = por %p101, %p102
      %p104 = scmp.ne.s32.totalorder %s93, %s94
      %p105 = scmp.eq.s32.totalorder %s21, 0
      %p106 = por %p104, %p105
      %p107 = scmp.ne.s32.totalorder %s93, %s94
      %p108 = scmp.eq.s32.totalorder %s22, 1
      %p109 = por %p107, %p108
      %p111 = scmp.ne.s32.totalorder %s94, %s110
      %p112 = scmp.eq.s32.totalorder %s22, 0
      %p113 = por %p111, %p112
      %s114 = ssub.s32 %s23, %s35
      %p115 = scmp.eq.s32.totalorder %s114, 0
      %s117 = sadd.s32 %s116, 1
      %s118 = scalar_select %p115, %s116, %s117
      %p121 = pneg %p115
      %p122 = scmp.eq.s32.totalorder %s16, 1
      %p123 = por %p121, %p122
      %p124 = scmp.ne.s32.totalorder %s116, %s119
      %p125 = scmp.eq.s32.totalorder %s16, 0
      %p126 = por %p124, %p125
      %p127 = scmp.ne.s32.totalorder %s116, %s119
      %p128 = scmp.eq.s32.totalorder %s21, 1
      %p129 = por %p127, %p128
      %p130 = scmp.ne.s32.totalorder %s119, %s120
      %p131 = scmp.eq.s32.totalorder %s21, 0
      %p132 = por %p130, %p131
      %p133 = scmp.ne.s32.totalorder %s119, %s120
      %p134 = scmp.eq.s32.totalorder %s22, 1
      %p135 = por %p133, %p134
      %p137 = scmp.ne.s32.totalorder %s120, %s136
      %p138 = scmp.eq.s32.totalorder %s22, 0
      %p139 = por %p137, %p138
      %s140 = ssub.s32 %s24, %s31
      %s141 = ssub.s32 %s23, %s35
      %s142 = sor.u32 %s140, %s141
      %p143 = scmp.eq.s32.totalorder %s142, 0
      %s145 = sadd.s32 %s144, 1
      %s146 = scalar_select %p143, %s144, %s145
      %p149 = pneg %p143
      %p150 = scmp.eq.s32.totalorder %s16, 1
      %p151 = por %p149, %p150
      %p152 = scmp.ne.s32.totalorder %s144, %s147
      %p153 = scmp.eq.s32.totalorder %s16, 0
      %p154 = por %p152, %p153
      %p155 = scmp.ne.s32.totalorder %s144, %s147
      %p156 = scmp.eq.s32.totalorder %s21, 1
      %p157 = por %p155, %p156
      %p158 = scmp.ne.s32.totalorder %s147, %s148
      %p159 = scmp.eq.s32.totalorder %s21, 0
      %p160 = por %p158, %p159
      %p161 = scmp.ne.s32.totalorder %s147, %s148
      %p162 = scmp.eq.s32.totalorder %s22, 1
      %p163 = por %p161, %p162
      %p165 = scmp.ne.s32.totalorder %s148, %s164
      %p166 = scmp.eq.s32.totalorder %s22, 0
      %p167 = por %p165, %p166
      %p168 = scmp.le.s32.totalorder 1, %s16
      %p169 = scmp.lt.s32.totalorder %s16, 3
      %p170 = pnand %p168, %p169
      %p171 = pneg %p170
      // Predicated region
      $region9: #{tpu_custom_call.1} parent=5 // pred_check
        _
      $region10: #{tpu_custom_call.1} parent=5 // pred_check_branch
        %173 = sbr.rel (%p170) target = $region12
      $region11: #{tpu_custom_call.1} parent=5 // pred_region
        %s174 = ssub.s32 %s16, 1
        // Predicated region
        $region13: #{tpu_custom_call.1} parent=11 // pred_check
          %p175 = pneg %p54
        $region14: #{tpu_custom_call.1} parent=11 // pred_check_branch
          %177 = sbr.rel (%p175) target = $region16
        $region15: #{tpu_custom_call.1} parent=11 // pred_region
          %s179 = ssub.s32 128, 128
          %180 = vsyncadd [#allocation3], %s179
          %s181 = smul.addr %s26, 128
          %s182 = scalar_lea.hbm %s0, %s181
          %s184 = sshll.u32 [#allocation2], 4
          %s185 = int_to_ptr.vmem [resolvable:$true] %s184
          %187 = dma.hbm_to_vmem [thread:$0]  %s182, 128, %s185, [#allocation3]
        $region16: #{tpu_custom_call.1} parent=11 // pred_fallthru
          _
        // Predicated region
        $region17: #{tpu_custom_call.1} parent=11 // pred_check
          %p188 = pneg %p80
        $region18: #{tpu_custom_call.1} parent=11 // pred_check_branch
          %190 = sbr.rel (%p188) target = $region20
        $region19: #{tpu_custom_call.1} parent=11 // pred_region
          %s192 = ssub.s32 128, 128
          %193 = vsyncadd [#allocation6], %s192
          %s194 = smul.addr %s26, 128
          %s195 = scalar_lea.hbm %s1, %s194
          %s197 = sshll.u32 [#allocation5], 4
          %s198 = int_to_ptr.vmem [resolvable:$true] %s197
          %200 = dma.hbm_to_vmem [thread:$0]  %s195, 128, %s198, [#allocation6]
        $region20: #{tpu_custom_call.1} parent=11 // pred_fallthru
          _
        // Predicated region
        $region21: #{tpu_custom_call.1} parent=11 // pred_check
          %p201 = pneg %p106
        $region22: #{tpu_custom_call.1} parent=11 // pred_check_branch
          %203 = sbr.rel (%p201) target = $region24
        $region23: #{tpu_custom_call.1} parent=11 // pred_region
          %s205 = ssub.s32 512, 512
          %206 = vsyncadd [#allocation6], %s205
          %s207 = smul.addr %s25, 128
          %s208 = scalar_lea.hbm %s2, %s207
          %s209 = sshll.u32 [#allocation7], 4
          %s210 = int_to_ptr.vmem [resolvable:$true] %s209
          %215 = dma.hbm_to_vmem [thread:$0]  %s208, 512, %s210, [#allocation6], 256, 128, 8
        $region24: #{tpu_custom_call.1} parent=11 // pred_fallthru
          _
        // Predicated region
        $region25: #{tpu_custom_call.1} parent=11 // pred_check
          %p216 = pneg %p132
        $region26: #{tpu_custom_call.1} parent=11 // pred_check_branch
          %218 = sbr.rel (%p216) target = $region28
        $region27: #{tpu_custom_call.1} parent=11 // pred_region
          %s220 = ssub.s32 256, 256
          %221 = vsyncadd [#allocation9], %s220
          %s222 = smul.addr %s25, 128
          %s223 = scalar_lea.hbm %s3, %s222
          %s224 = sshll.u32 [#allocation8], 4
          %s225 = int_to_ptr.vmem [resolvable:$true] %s224
          %230 = dma.hbm_to_vmem [thread:$0]  %s223, 256, %s225, [#allocation9], 256, 128, 8
        $region28: #{tpu_custom_call.1} parent=11 // pred_fallthru
          _
      $region12: #{tpu_custom_call.1} parent=5 // pred_fallthru
        _
      %p231 = scmp.lt.s32.totalorder %s16, 2
      // Predicated region
      $region29: #{tpu_custom_call.1} parent=5 // pred_check
        %p232 = pneg %p231
      $region30: #{tpu_custom_call.1} parent=5 // pred_check_branch
        %234 = sbr.rel (%p232) target = $region32
      $region31: #{tpu_custom_call.1} parent=5 // pred_region
        _
      $region32: #{tpu_custom_call.1} parent=5 // pred_fallthru
        _
      %p235 = scmp.le.s32.totalorder 1, %s16
      %p236 = scmp.lt.s32.totalorder %s16, 3
      %p237 = pnand %p235, %p236
      %p238 = pneg %p237
      // Predicated region
      $region33: #{tpu_custom_call.1} parent=5 // pred_check
        _
      $region34: #{tpu_custom_call.1} parent=5 // pred_check_branch
        %240 = sbr.rel (%p237) target = $region36
      $region35: #{tpu_custom_call.1} parent=5 // pred_region
        %s241 = ssub.s32 %s16, 1
        // Predicated region
        $region37: #{tpu_custom_call.1} parent=35 // pred_check
          %p242 = pneg %p54
        $region38: #{tpu_custom_call.1} parent=35 // pred_check_branch
          %244 = sbr.rel (%p242) target = $region40
        $region39: #{tpu_custom_call.1} parent=35 // pred_region
          %245 = dma.done [#allocation3], 128
        $region40: #{tpu_custom_call.1} parent=35 // pred_fallthru
          _
        // Predicated region
        $region41: #{tpu_custom_call.1} parent=35 // pred_check
          %p246 = pneg %p80
        $region42: #{tpu_custom_call.1} parent=35 // pred_check_branch
          %248 = sbr.rel (%p246) target = $region44
        $region43: #{tpu_custom_call.1} parent=35 // pred_region
          %249 = dma.done [#allocation6], 128
        $region44: #{tpu_custom_call.1} parent=35 // pred_fallthru
          _
        // Predicated region
        $region45: #{tpu_custom_call.1} parent=35 // pred_check
          %p250 = pneg %p106
        $region46: #{tpu_custom_call.1} parent=35 // pred_check_branch
          %252 = sbr.rel (%p250) target = $region48
        $region47: #{tpu_custom_call.1} parent=35 // pred_region
          %253 = dma.done [#allocation6], 512
        $region48: #{tpu_custom_call.1} parent=35 // pred_fallthru
          _
        // Predicated region
        $region49: #{tpu_custom_call.1} parent=35 // pred_check
          %p254 = pneg %p132
        $region50: #{tpu_custom_call.1} parent=35 // pred_check_branch
          %256 = sbr.rel (%p254) target = $region52
        $region51: #{tpu_custom_call.1} parent=35 // pred_region
          %257 = dma.done [#allocation9], 256
        $region52: #{tpu_custom_call.1} parent=35 // pred_fallthru
          _
        %p258 = pneg %p54
        %p259 = pneg %p51
        %p260 = pneg %p80
        %p261 = pneg %p77
        %p262 = pneg %p106
        %p263 = pneg %p103
        %p264 = pneg %p132
        %p265 = pneg %p129
        %p266 = pneg %p160
        %p267 = pneg %p157
        %s268 = sand.u32 %s147, 1
        %s269 = scalar_lea.sflag [#allocation4], %s268
        %s270 = sand.u32 %s147, 1
        %s271 = smul.addr %s270, 8
        %s272 = scalar_lea.vmem [#allocation10], %s271
        %v273 = vld [vmem:[#allocation7] sm:$0xff]
        %v274 = vld [vmem:[#allocation7 + $0x8] sm:$0xff]
        %v275 = vld [vmem:[#allocation7 + $0x10] sm:$0xff]
        %v276 = vld [vmem:[#allocation7 + $0x18] sm:$0xff]
        %v277 = vld [vmem:[#allocation2] sm:$0xff]
        %vm278 = vcmask 261120
        %v280 = vsel %vm278, %v277, 0
        %282 = vmatprep.subr.mxu0 0.0
        %283 = vmatpush1.msra.mxu0 0.0
        %284 = vmatprep.subr.mxu0 0.0
        %285 = vmatpush1.msra.mxu0 0.0
        %286 = vmatprep.subr.mxu0 0.0
        %287 = vmatpush1.msra.mxu0 0.0
        %288 = vmatprep.subr.mxu0 0.0
        %289 = vmatpush1.msra.mxu0 0.0
        %290 = vmatprep.subr.mxu0 0.0
        %291 = vmatpush1.msra.mxu0 0.0
        %292 = vmatprep.subr.mxu0 0.0
        %293 = vmatpush1.msra.mxu0 0.0
        %294 = vmatprep.subr.mxu0 0.0
        %295 = vmatpush1.msra.mxu0 0.0
        %296 = vmatprep.subr.mxu0 0.0
        %297 = vmatpush1.msra.mxu0 0.0
        %298 = vmatprep.subr.mxu0 0.0
        %299 = vmatpush1.msra.mxu0 0.0
        %300 = vmatprep.subr.mxu0 0.0
        %301 = vmatpush1.msra.mxu0 0.0
        %302 = vmatprep.subr.mxu0 0.0
        %303 = vmatpush1.msra.mxu0 0.0
        %304 = vmatprep.subr.mxu0 0.0
        %305 = vmatpush1.msra.mxu0 0.0
        %306 = vmatprep.subr.mxu0 0.0
        %307 = vmatpush1.msra.mxu0 %v276
        %308 = vmatprep.subr.mxu0 0.0
        %309 = vmatpush1.msra.mxu0 %v275
        %310 = vmatprep.subr.mxu0 0.0
        %311 = vmatpush1.msra.mxu0 %v274
        %312 = vmatprep.subr.mxu0 0.0
        %313 = vmatpush1.msra.mxu0 %v273
        %314 = vmatprep.subr.mxu0 0.0
        %315 = vmatpush2.msra.mxu0 0.0
        %316 = vmatprep.subr.mxu0 0.0
        %317 = vmatpush2.msra.mxu0 0.0
        %318 = vmatprep.subr.mxu0 0.0
        %319 = vmatpush2.msra.mxu0 0.0
        %320 = vmatprep.subr.mxu0 0.0
        %321 = vmatpush2.msra.mxu0 0.0
        %322 = vmatprep.subr.mxu0 0.0
        %323 = vmatpush2.msra.mxu0 0.0
        %324 = vmatprep.subr.mxu0 0.0
        %325 = vmatpush2.msra.mxu0 0.0
        %326 = vmatprep.subr.mxu0 0.0
        %327 = vmatpush2.msra.mxu0 0.0
        %328 = vmatprep.subr.mxu0 0.0
        %329 = vmatpush2.msra.mxu0 0.0
        %330 = vmatprep.subr.mxu0 0.0
        %331 = vmatpush2.msra.mxu0 0.0
        %332 = vmatprep.subr.mxu0 0.0
        %333 = vmatpush2.msra.mxu0 0.0
        %334 = vmatprep.subr.mxu0 0.0
        %335 = vmatpush2.msra.mxu0 0.0
        %336 = vmatprep.subr.mxu0 0.0
        %337 = vmatpush2.msra.mxu0 0.0
        %338 = vmatprep.subr.mxu0 0.0
        %339 = vmatpush2.msra.mxu0 0.0
        %340 = vmatprep.subr.mxu0 0.0
        %341 = vmatpush2.msra.mxu0 0.0
        %342 = vmatprep.subr.mxu0 0.0
        %343 = vmatpush2.msra.mxu0 0.0
        %344 = vmatprep.subr.mxu0 0.0
        %345 = vmatpush2.msra.mxu0 0.0
        %346 = vmatprep.mubr.f32.mxu0 0.0
        %347 = vmatmul.mubr.f32.gmra.mxu0 %v280
        %v348 = vpop.f32.mrf.mxu0
        %v349 = vadd.f32 0.0, %v348
        %v350 = vpop.f32.mrf.mxu0
        %351 = vdwg.mxu0
        %v352 = vld [vmem:[#allocation8] sm:$0xff]
        %v353 = vld [vmem:[#allocation8 + $0x8] sm:$0xff]
        %v354 = vld [vmem:[#allocation5] sm:$0xff]
        %vm355 = vcmask 130048
        %v357 = vsel %vm355, %v354, 0
        %359 = vmatprep.subr.mxu0 0.0
        %360 = vmatpush1.msra.mxu0 0.0
        %361 = vmatprep.subr.mxu0 0.0
        %362 = vmatpush1.msra.mxu0 0.0
        %363 = vmatprep.subr.mxu0 0.0
        %364 = vmatpush1.msra.mxu0 0.0
        %365 = vmatprep.subr.mxu0 0.0
        %366 = vmatpush1.msra.mxu0 0.0
        %367 = vmatprep.subr.mxu0 0.0
        %368 = vmatpush1.msra.mxu0 0.0
        %369 = vmatprep.subr.mxu0 0.0
        %370 = vmatpush1.msra.mxu0 0.0
        %371 = vmatprep.subr.mxu0 0.0
        %372 = vmatpush1.msra.mxu0 0.0
        %373 = vmatprep.subr.mxu0 0.0
        %374 = vmatpush1.msra.mxu0 0.0
        %375 = vmatprep.subr.mxu0 0.0
        %376 = vmatpush1.msra.mxu0 0.0
        %377 = vmatprep.subr.mxu0 0.0
        %378 = vmatpush1.msra.mxu0 0.0
        %379 = vmatprep.subr.mxu0 0.0
        %380 = vmatpush1.msra.mxu0 0.0
        %381 = vmatprep.subr.mxu0 0.0
        %382 = vmatpush1.msra.mxu0 0.0
        %383 = vmatprep.subr.mxu0 0.0
        %384 = vmatpush1.msra.mxu0 0.0
        %385 = vmatprep.subr.mxu0 0.0
        %386 = vmatpush1.msra.mxu0 0.0
        %387 = vmatprep.subr.mxu0 0.0
        %388 = vmatpush1.msra.mxu0 %v353
        %389 = vmatprep.subr.mxu0 0.0
        %390 = vmatpush1.msra.mxu0 %v352
        %391 = vmatprep.subr.mxu0 0.0
        %392 = vmatpush2.msra.mxu0 0.0
        %393 = vmatprep.subr.mxu0 0.0
        %394 = vmatpush2.msra.mxu0 0.0
        %395 = vmatprep.subr.mxu0 0.0
        %396 = vmatpush2.msra.mxu0 0.0
        %397 = vmatprep.subr.mxu0 0.0
        %398 = vmatpush2.msra.mxu0 0.0
        %399 = vmatprep.subr.mxu0 0.0
        %400 = vmatpush2.msra.mxu0 0.0
        %401 = vmatprep.subr.mxu0 0.0
        %402 = vmatpush2.msra.mxu0 0.0
        %403 = vmatprep.subr.mxu0 0.0
        %404 = vmatpush2.msra.mxu0 0.0
        %405 = vmatprep.subr.mxu0 0.0
        %406 = vmatpush2.msra.mxu0 0.0
        %407 = vmatprep.subr.mxu0 0.0
        %408 = vmatpush2.msra.mxu0 0.0
        %409 = vmatprep.subr.mxu0 0.0
        %410 = vmatpush2.msra.mxu0 0.0
        %411 = vmatprep.subr.mxu0 0.0
        %412 = vmatpush2.msra.mxu0 0.0
        %413 = vmatprep.subr.mxu0 0.0
        %414 = vmatpush2.msra.mxu0 0.0
        %415 = vmatprep.subr.mxu0 0.0
        %416 = vmatpush2.msra.mxu0 0.0
        %417 = vmatprep.subr.mxu0 0.0
        %418 = vmatpush2.msra.mxu0 0.0
        %419 = vmatprep.subr.mxu0 0.0
        %420 = vmatpush2.msra.mxu0 0.0
        %421 = vmatprep.subr.mxu0 0.0
        %422 = vmatpush2.msra.mxu0 0.0
        %423 = vmatprep.mubr.f32.mxu0 0.0
        %424 = vmatmul.mubr.f32.gmra.mxu0 %v357
        %v425 = vpop.f32.mrf.mxu0
        %v426 = vadd.f32 0.0, %v425
        %v427 = vpop.f32.mrf.mxu0
        %428 = vdwg.mxu0
        %v429 = vmul.f32 %v349, %v426
        %v430 = vmul.f32 %v429, 0.0625
        %431 = vst [vmem:[%s272] sm:$0xff] %v430
        %s432 = sand.u32 %s147, 1
        %s433 = scalar_lea.sflag [#allocation4], %s432
        %s434 = sand.u32 %s147, 1
        %s435 = smul.addr %s434, 8
        %s436 = scalar_lea.vmem [#allocation10], %s435
        // Predicated region
        $region53: #{tpu_custom_call.1} parent=35 // pred_check
          %p437 = pneg %p157
        $region54: #{tpu_custom_call.1} parent=35 // pred_check_branch
          %439 = sbr.rel (%p437) target = $region56
        $region55: #{tpu_custom_call.1} parent=35 // pred_region
          %s441 = ssub.s32 128, 128
          %442 = vsyncadd %s433, %s441
          %s443 = smul.addr %s26, 2
          %s444 = sadd.s32 %s25, %s443
          %s445 = smul.addr %s444, 128
          %s446 = scalar_lea.hbm %s4, %s445
          %s448 = sshll.u32 %s436, 4
          %s449 = int_to_ptr.vmem [resolvable:$true] %s448
          %451 = dma.vmem_to_hbm [thread:$0]  %s449, 128, %s446, %s433
        $region56: #{tpu_custom_call.1} parent=35 // pred_fallthru
          _
      $region36: #{tpu_custom_call.1} parent=5 // pred_fallthru
        _
      %p452 = scmp.le.s32.totalorder 2, %s16
      // Predicated region
      $region57: #{tpu_custom_call.1} parent=5 // pred_check
        %p453 = pneg %p452
      $region58: #{tpu_custom_call.1} parent=5 // pred_check_branch
        %455 = sbr.rel (%p453) target = $region60
      $region59: #{tpu_custom_call.1} parent=5 // pred_region
        %s456 = ssub.s32 %s16, 2
        // Predicated region
        $region61: #{tpu_custom_call.1} parent=59 // pred_check
          %p457 = pneg %p163
        $region62: #{tpu_custom_call.1} parent=59 // pred_check_branch
          %459 = sbr.rel (%p457) target = $region64
        $region63: #{tpu_custom_call.1} parent=59 // pred_region
          %s460 = sand.u32 %s148, 1
          %s461 = scalar_lea.sflag [#allocation4], %s460
          %s462 = sand.u32 %s148, 1
          %s463 = smul.addr %s462, 8
          %s464 = scalar_lea.vmem [#allocation10], %s463
          %465 = dma.done %s461, 128
        $region64: #{tpu_custom_call.1} parent=59 // pred_fallthru
          _
      $region60: #{tpu_custom_call.1} parent=5 // pred_fallthru
        _
    $region6: #{tpu_custom_call.1} parent=1 // loop_footer
      %s20 = sadd.s32 1, %s16
    $region7: #{tpu_custom_call.1} parent=1 // loop_footer_branch
      %15 = sbr.rel target = $region3
    $region8: #{tpu_custom_call.1} parent=1 // loop_exit
      _
    %466 = vsyncpa [#allocation3], 1
    %s467 = scalar_lea.sflag [#allocation3], 1
    %468 = vsyncpa %s467, 1
    %469 = vsyncpa [#allocation6], 1
    %470 = vsyncpa [#allocation9], 1
    %471 = vsyncpa [#allocation4], 1
    %s472 = scalar_lea.sflag [#allocation4], 1
    %473 = vsyncpa %s472, 1

// kernel: tpu_custom_call.1
$region0: #{tpu_custom_call.1}
  #allocation0 [shape = 'u32[]', space=smem, size = 0x4, offset = 0x4, fixed_abs, tag = 'smem constant byte address 0x4 - core index']
  #allocation1 [shape = 'u32[144,128]{1,0:T(1,128)}', space=vmem, size = 0x12000, scoped, tag = 'internal scratch']
  %s0 = inlined_call_operand.hbm [shape: f32[8,32], index: 0, kind: input, shape index: {}]
  %s1 = inlined_call_operand.hbm [shape: f32[8,16], index: 1, kind: input, shape index: {}]
  %s2 = inlined_call_operand.hbm [shape: f32[32,256], index: 2, kind: input, shape index: {}]
  %s3 = inlined_call_operand.hbm [shape: f32[16,256], index: 3, kind: input, shape index: {}]
  %s4 = inlined_call_operand.hbm [shape: f32[8,256], index: 4, kind: output, shape index: {}]
  %s5 = sld [smem:[#allocation0]]
  $region65: #{tpu_custom_call.1} parent=0
    _
  %s7 = ssub.s32 1, %s5
  %s8 = scalar_select 0, %s7, %s5
  $region1: #{tpu_custom_call.1} parent=0
    #allocation2 [shape = 'u8[4096]{0}', space=vmem, size = 0x1000, scoped, tag = 'input window, operand 0, single buffered']
    #allocation3 [shape = 's32[2]{0}', space=sflag, size = 0x8, scoped, tag = 'scoped memory for tpu_custom_call.1']
    #allocation4 [shape = 's32[2]{0}', space=sflag, size = 0x8, scoped, tag = 'scoped memory for tpu_custom_call.1']
    #allocation5 [shape = 'u8[4096]{0}', space=vmem, size = 0x1000, scoped, tag = 'input window, operand 1, single buffered']
    #allocation6 [shape = 's32[1]{0}', space=sflag, size = 0x4, scoped, tag = 'scoped memory for tpu_custom_call.1']
    #allocation7 [shape = 'u8[32768]{0}', space=vmem, size = 0x8000, scoped, tag = 'input window, operand 2']
    #allocation8 [shape = 'u8[16384]{0}', space=vmem, size = 0x4000, scoped, tag = 'input window, operand 3']
    #allocation9 [shape = 'u8[8192]{0}', space=vmem, size = 0x2000, scoped, tag = 'output window, operand 0']
    %9 = vsyncpa [#allocation3], 0
    %10 = vsyncpa [#allocation6], 0
    %11 = vsyncpa [#allocation4], 0
    %s12 = scalar_lea.sflag [#allocation4], 1
    %13 = vsyncpa %s12, 0
    loop: start=0, step=1, limit=4
    $region2: #{tpu_custom_call.1} parent=1 // loop_pre_header
      _
    $region3: #{tpu_custom_call.1} parent=1 // loop_header
      %s15 = sphi 0, %s19
      %p16 = scmp.ge.s32.totalorder %s15, 4
      %s22 = sphi 0, %s34
      %s23 = sphi 0, %s30
      %s24 = sphi 0, %s22
      %s25 = sphi 0, %s23
      %s26 = sphi 0, %s24
      %s27 = sphi 0, %s25
      %s37 = sphi 0, %s39
      %s40 = sphi 0, %s37
      %s41 = sphi 0, %s40
      %s57 = sphi 0, %s41
      %s63 = sphi 0, %s65
      %s66 = sphi 0, %s63
      %s67 = sphi 0, %s66
      %s83 = sphi 0, %s67
      %s89 = sphi 0, %s91
      %s92 = sphi 0, %s89
      %s93 = sphi 0, %s92
      %s109 = sphi 0, %s93
      %s115 = sphi 0, %s117
      %s118 = sphi 0, %s115
      %s119 = sphi 0, %s118
      %s135 = sphi 0, %s119
      %s143 = sphi 0, %s145
      %s146 = sphi 0, %s143
      %s147 = sphi 0, %s146
      %s163 = sphi 0, %s147
    $region4: #{tpu_custom_call.1} parent=1 // loop_header_branch
      %18 = sbr.rel (%p16) target = $region8
    $region5: #{tpu_custom_call.1} parent=1 // loop_body
      %s20 = ssub.s32 %s15, 1
      %s21 = ssub.s32 %s15, 2
      %s28 = sadd.s32 1, %s23
      %p29 = scmp.ge.s32.totalorder %s28, 1
      %s30 = scalar_select %p29, 0, %s28
      %s31 = sadd.s32 1, %s22
      %s32 = scalar_select %p29, %s31, %s22
      %p33 = scmp.ge.s32.totalorder %s32, 2
      %s34 = scalar_select %p33, 0, %s32
      %s35 = ssub.s32 %s23, %s30
      %p36 = scmp.eq.s32.totalorder %s35, 0
      %s38 = sadd.s32 %s37, 1
      %s39 = scalar_select %p36, %s37, %s38
      %p42 = pneg %p36
      %p43 = scmp.eq.s32.totalorder %s15, 1
      %p44 = por %p42, %p43
      %p45 = scmp.ne.s32.totalorder %s37, %s40
      %p46 = scmp.eq.s32.totalorder %s15, 0
      %p47 = por %p45, %p46
      %p48 = scmp.ne.s32.totalorder %s37, %s40
      %p49 = scmp.eq.s32.totalorder %s20, 1
      %p50 = por %p48, %p49
      %p51 = scmp.ne.s32.totalorder %s40, %s41
      %p52 = scmp.eq.s32.totalorder %s20, 0
      %p53 = por %p51, %p52
      %p54 = scmp.ne.s32.totalorder %s40, %s41
      %p55 = scmp.eq.s32.totalorder %s21, 1
      %p56 = por %p54, %p55
      %p58 = scmp.ne.s32.totalorder %s41, %s57
      %p59 = scmp.eq.s32.totalorder %s21, 0
      %p60 = por %p58, %p59
      %s61 = ssub.s32 %s23, %s30
      %p62 = scmp.eq.s32.totalorder %s61, 0
      %s64 = sadd.s32 %s63, 1
      %s65 = scalar_select %p62, %s63, %s64
      %p68 = pneg %p62
      %p69 = scmp.eq.s32.totalorder %s15, 1
      %p70 = por %p68, %p69
      %p71 = scmp.ne.s32.totalorder %s63, %s66
      %p72 = scmp.eq.s32.totalorder %s15, 0
      %p73 = por %p71, %p72
      %p74 = scmp.ne.s32.totalorder %s63, %s66
      %p75 = scmp.eq.s32.totalorder %s20, 1
      %p76 = por %p74, %p75
      %p77 = scmp.ne.s32.totalorder %s66, %s67
      %p78 = scmp.eq.s32.totalorder %s20, 0
      %p79 = por %p77, %p78
      %p80 = scmp.ne.s32.totalorder %s66, %s67
      %p81 = scmp.eq.s32.totalorder %s21, 1
      %p82 = por %p80, %p81
      %p84 = scmp.ne.s32.totalorder %s67, %s83
      %p85 = scmp.eq.s32.totalorder %s21, 0
      %p86 = por %p84, %p85
      %s87 = ssub.s32 %s22, %s34
      %p88 = scmp.eq.s32.totalorder %s87, 0
      %s90 = sadd.s32 %s89, 1
      %s91 = scalar_select %p88, %s89, %s90
      %p94 = pneg %p88
      %p95 = scmp.eq.s32.totalorder %s15, 1
      %p96 = por %p94, %p95
      %p97 = scmp.ne.s32.totalorder %s89, %s92
      %p98 = scmp.eq.s32.totalorder %s15, 0
      %p99 = por %p97, %p98
      %p100 = scmp.ne.s32.totalorder %s89, %s92
      %p101 = scmp.eq.s32.totalorder %s20, 1
      %p102 = por %p100, %p101
      %p103 = scmp.ne.s32.totalorder %s92, %s93
      %p104 = scmp.eq.s32.totalorder %s20, 0
      %p105 = por %p103, %p104
      %p106 = scmp.ne.s32.totalorder %s92, %s93
      %p107 = scmp.eq.s32.totalorder %s21, 1
      %p108 = por %p106, %p107
      %p110 = scmp.ne.s32.totalorder %s93, %s109
      %p111 = scmp.eq.s32.totalorder %s21, 0
      %p112 = por %p110, %p111
      %s113 = ssub.s32 %s22, %s34
      %p114 = scmp.eq.s32.totalorder %s113, 0
      %s116 = sadd.s32 %s115, 1
      %s117 = scalar_select %p114, %s115, %s116
      %p120 = pneg %p114
      %p121 = scmp.eq.s32.totalorder %s15, 1
      %p122 = por %p120, %p121
      %p123 = scmp.ne.s32.totalorder %s115, %s118
      %p124 = scmp.eq.s32.totalorder %s15, 0
      %p125 = por %p123, %p124
      %p126 = scmp.ne.s32.totalorder %s115, %s118
      %p127 = scmp.eq.s32.totalorder %s20, 1
      %p128 = por %p126, %p127
      %p129 = scmp.ne.s32.totalorder %s118, %s119
      %p130 = scmp.eq.s32.totalorder %s20, 0
      %p131 = por %p129, %p130
      %p132 = scmp.ne.s32.totalorder %s118, %s119
      %p133 = scmp.eq.s32.totalorder %s21, 1
      %p134 = por %p132, %p133
      %p136 = scmp.ne.s32.totalorder %s119, %s135
      %p137 = scmp.eq.s32.totalorder %s21, 0
      %p138 = por %p136, %p137
      %s139 = ssub.s32 %s23, %s30
      %s140 = ssub.s32 %s22, %s34
      %s141 = sor.u32 %s139, %s140
      %p142 = scmp.eq.s32.totalorder %s141, 0
      %s144 = sadd.s32 %s143, 1
      %s145 = scalar_select %p142, %s143, %s144
      %p148 = pneg %p142
      %p149 = scmp.eq.s32.totalorder %s15, 1
      %p150 = por %p148, %p149
      %p151 = scmp.ne.s32.totalorder %s143, %s146
      %p152 = scmp.eq.s32.totalorder %s15, 0
      %p153 = por %p151, %p152
      %p154 = scmp.ne.s32.totalorder %s143, %s146
      %p155 = scmp.eq.s32.totalorder %s20, 1
      %p156 = por %p154, %p155
      %p157 = scmp.ne.s32.totalorder %s146, %s147
      %p158 = scmp.eq.s32.totalorder %s20, 0
      %p159 = por %p157, %p158
      %p160 = scmp.ne.s32.totalorder %s146, %s147
      %p161 = scmp.eq.s32.totalorder %s21, 1
      %p162 = por %p160, %p161
      %p164 = scmp.ne.s32.totalorder %s147, %s163
      %p165 = scmp.eq.s32.totalorder %s21, 0
      %p166 = por %p164, %p165
      %p167 = scmp.le.s32.totalorder 1, %s15
      %p168 = scmp.lt.s32.totalorder %s15, 3
      %p169 = pnand %p167, %p168
      %p170 = pneg %p169
      // Predicated region
      $region9: #{tpu_custom_call.1} parent=5 // pred_check
        _
      $region10: #{tpu_custom_call.1} parent=5 // pred_check_branch
        %172 = sbr.rel (%p169) target = $region12
      $region11: #{tpu_custom_call.1} parent=5 // pred_region
        %s173 = ssub.s32 %s15, 1
        // Predicated region
        $region13: #{tpu_custom_call.1} parent=11 // pred_check
          %p174 = pneg %p53
        $region14: #{tpu_custom_call.1} parent=11 // pred_check_branch
          %176 = sbr.rel (%p174) target = $region16
        $region15: #{tpu_custom_call.1} parent=11 // pred_region
          %s178 = ssub.s32 128, 128
          %179 = vsyncadd [#allocation3], %s178
          %s180 = smul.addr %s25, 128
          %s181 = scalar_lea.hbm %s0, %s180
          %s183 = sshll.u32 [#allocation2], 4
          %s184 = int_to_ptr.vmem [resolvable:$true] %s183
          %186 = dma.hbm_to_vmem [thread:$0]  %s181, 128, %s184, [#allocation3]
        $region16: #{tpu_custom_call.1} parent=11 // pred_fallthru
          _
        // Predicated region
        $region17: #{tpu_custom_call.1} parent=11 // pred_check
          %p187 = pneg %p79
        $region18: #{tpu_custom_call.1} parent=11 // pred_check_branch
          %189 = sbr.rel (%p187) target = $region20
        $region19: #{tpu_custom_call.1} parent=11 // pred_region
          %s191 = ssub.s32 128, 128
          %192 = vsyncadd [#allocation6], %s191
          %s193 = smul.addr %s25, 128
          %s194 = scalar_lea.hbm %s1, %s193
          %s196 = sshll.u32 [#allocation5], 4
          %s197 = int_to_ptr.vmem [resolvable:$true] %s196
          %199 = dma.hbm_to_vmem [thread:$0]  %s194, 128, %s197, [#allocation6]
        $region20: #{tpu_custom_call.1} parent=11 // pred_fallthru
          _
      $region12: #{tpu_custom_call.1} parent=5 // pred_fallthru
        _
      %p200 = scmp.lt.s32.totalorder %s15, 2
      // Predicated region
      $region21: #{tpu_custom_call.1} parent=5 // pred_check
        %p201 = pneg %p200
      $region22: #{tpu_custom_call.1} parent=5 // pred_check_branch
        %203 = sbr.rel (%p201) target = $region24
      $region23: #{tpu_custom_call.1} parent=5 // pred_region
        // Predicated region
        $region25: #{tpu_custom_call.1} parent=23 // pred_check
          %p204 = pneg %p99
        $region26: #{tpu_custom_call.1} parent=23 // pred_check_branch
          %206 = sbr.rel (%p204) target = $region28
        $region27: #{tpu_custom_call.1} parent=23 // pred_region
          %s207 = sand.u32 %s15, 1
          %s208 = scalar_lea.sflag [#allocation3], %s207
          %s209 = sand.u32 %s89, 1
          %s210 = smul.addr %s209, 32
          %s211 = scalar_lea.vmem [#allocation7], %s210
          %s213 = ssub.s32 512, 512
          %214 = vsyncadd %s208, %s213
          %s215 = smul.addr %s22, 128
          %s216 = scalar_lea.hbm %s2, %s215
          %s217 = sshll.u32 %s211, 4
          %s218 = int_to_ptr.vmem [resolvable:$true] %s217
          %223 = dma.hbm_to_vmem [thread:$0]  %s216, 512, %s218, %s208, 256, 128, 8
        $region28: #{tpu_custom_call.1} parent=23 // pred_fallthru
          _
        // Predicated region
        $region29: #{tpu_custom_call.1} parent=23 // pred_check
          %p224 = pneg %p125
        $region30: #{tpu_custom_call.1} parent=23 // pred_check_branch
          %226 = sbr.rel (%p224) target = $region32
        $region31: #{tpu_custom_call.1} parent=23 // pred_region
          %s227 = sand.u32 %s15, 1
          %s228 = scalar_lea.sflag [#allocation3], %s227
          %s229 = sand.u32 %s115, 1
          %s230 = smul.addr %s229, 16
          %s231 = scalar_lea.vmem [#allocation8], %s230
          %s233 = ssub.s32 256, 256
          %234 = vsyncadd %s228, %s233
          %s235 = smul.addr %s22, 128
          %s236 = scalar_lea.hbm %s3, %s235
          %s237 = sshll.u32 %s231, 4
          %s238 = int_to_ptr.vmem [resolvable:$true] %s237
          %243 = dma.hbm_to_vmem [thread:$0]  %s236, 256, %s238, %s228, 256, 128, 8
        $region32: #{tpu_custom_call.1} parent=23 // pred_fallthru
          _
      $region24: #{tpu_custom_call.1} parent=5 // pred_fallthru
        _
      %p244 = scmp.le.s32.totalorder 1, %s15
      %p245 = scmp.lt.s32.totalorder %s15, 3
      %p246 = pnand %p244, %p245
      %p247 = pneg %p246
      // Predicated region
      $region33: #{tpu_custom_call.1} parent=5 // pred_check
        _
      $region34: #{tpu_custom_call.1} parent=5 // pred_check_branch
        %249 = sbr.rel (%p246) target = $region36
      $region35: #{tpu_custom_call.1} parent=5 // pred_region
        %s250 = ssub.s32 %s15, 1
        // Predicated region
        $region37: #{tpu_custom_call.1} parent=35 // pred_check
          %p251 = pneg %p53
        $region38: #{tpu_custom_call.1} parent=35 // pred_check_branch
          %253 = sbr.rel (%p251) target = $region40
        $region39: #{tpu_custom_call.1} parent=35 // pred_region
          %254 = dma.done [#allocation3], 128
        $region40: #{tpu_custom_call.1} parent=35 // pred_fallthru
          _
        // Predicated region
        $region41: #{tpu_custom_call.1} parent=35 // pred_check
          %p255 = pneg %p79
        $region42: #{tpu_custom_call.1} parent=35 // pred_check_branch
          %257 = sbr.rel (%p255) target = $region44
        $region43: #{tpu_custom_call.1} parent=35 // pred_region
          %258 = dma.done [#allocation6], 128
        $region44: #{tpu_custom_call.1} parent=35 // pred_fallthru
          _
        %s259 = sand.u32 %s20, 1
        %s260 = scalar_lea.sflag [#allocation3], %s259
        %s261 = sand.u32 %s92, 1
        %s262 = smul.addr %s261, 32
        %s263 = scalar_lea.vmem [#allocation7], %s262
        // Predicated region
        $region45: #{tpu_custom_call.1} parent=35 // pred_check
          %p264 = pneg %p105
        $region46: #{tpu_custom_call.1} parent=35 // pred_check_branch
          %266 = sbr.rel (%p264) target = $region48
        $region47: #{tpu_custom_call.1} parent=35 // pred_region
          %267 = dma.done %s260, 512
        $region48: #{tpu_custom_call.1} parent=35 // pred_fallthru
          _
        %s268 = sand.u32 %s20, 1
        %s269 = scalar_lea.sflag [#allocation3], %s268
        %s270 = sand.u32 %s118, 1
        %s271 = smul.addr %s270, 16
        %s272 = scalar_lea.vmem [#allocation8], %s271
        // Predicated region
        $region49: #{tpu_custom_call.1} parent=35 // pred_check
          %p273 = pneg %p131
        $region50: #{tpu_custom_call.1} parent=35 // pred_check_branch
          %275 = sbr.rel (%p273) target = $region52
        $region51: #{tpu_custom_call.1} parent=35 // pred_region
          %276 = dma.done %s269, 256
        $region52: #{tpu_custom_call.1} parent=35 // pred_fallthru
          _
        %p277 = pneg %p53
        %p278 = pneg %p50
        %p279 = pneg %p79
        %p280 = pneg %p76
        %s281 = sand.u32 %s20, 1
        %s282 = scalar_lea.sflag [#allocation3], %s281
        %s283 = sand.u32 %s92, 1
        %s284 = smul.addr %s283, 32
        %s285 = scalar_lea.vmem [#allocation7], %s284
        %p286 = pneg %p105
        %p287 = pneg %p102
        %s288 = sand.u32 %s20, 1
        %s289 = scalar_lea.sflag [#allocation3], %s288
        %s290 = sand.u32 %s118, 1
        %s291 = smul.addr %s290, 16
        %s292 = scalar_lea.vmem [#allocation8], %s291
        %p293 = pneg %p131
        %p294 = pneg %p128
        %p295 = pneg %p159
        %p296 = pneg %p156
        %s297 = sand.u32 %s146, 1
        %s298 = scalar_lea.sflag [#allocation4], %s297
        %s299 = sand.u32 %s146, 1
        %s300 = smul.addr %s299, 8
        %s301 = scalar_lea.vmem [#allocation9], %s300
        %v302 = vld [vmem:[%s263] sm:$0xff]
        %v303 = vld [vmem:[%s263 + $0x8] sm:$0xff]
        %v304 = vld [vmem:[%s263 + $0x10] sm:$0xff]
        %v305 = vld [vmem:[%s263 + $0x18] sm:$0xff]
        %v306 = vld [vmem:[#allocation2] sm:$0xff]
        %vm307 = vcmask 261120
        %v309 = vsel %vm307, %v306, 0
        %311 = vmatprep.subr.mxu0 0.0
        %312 = vmatpush1.msra.mxu0 0.0
        %313 = vmatprep.subr.mxu0 0.0
        %314 = vmatpush1.msra.mxu0 0.0
        %315 = vmatprep.subr.mxu0 0.0
        %316 = vmatpush1.msra.mxu0 0.0
        %317 = vmatprep.subr.mxu0 0.0
        %318 = vmatpush1.msra.mxu0 0.0
        %319 = vmatprep.subr.mxu0 0.0
        %320 = vmatpush1.msra.mxu0 0.0
        %321 = vmatprep.subr.mxu0 0.0
        %322 = vmatpush1.msra.mxu0 0.0
        %323 = vmatprep.subr.mxu0 0.0
        %324 = vmatpush1.msra.mxu0 0.0
        %325 = vmatprep.subr.mxu0 0.0
        %326 = vmatpush1.msra.mxu0 0.0
        %327 = vmatprep.subr.mxu0 0.0
        %328 = vmatpush1.msra.mxu0 0.0
        %329 = vmatprep.subr.mxu0 0.0
        %330 = vmatpush1.msra.mxu0 0.0
        %331 = vmatprep.subr.mxu0 0.0
        %332 = vmatpush1.msra.mxu0 0.0
        %333 = vmatprep.subr.mxu0 0.0
        %334 = vmatpush1.msra.mxu0 0.0
        %335 = vmatprep.subr.mxu0 0.0
        %336 = vmatpush1.msra.mxu0 %v305
        %337 = vmatprep.subr.mxu0 0.0
        %338 = vmatpush1.msra.mxu0 %v304
        %339 = vmatprep.subr.mxu0 0.0
        %340 = vmatpush1.msra.mxu0 %v303
        %341 = vmatprep.subr.mxu0 0.0
        %342 = vmatpush1.msra.mxu0 %v302
        %343 = vmatprep.subr.mxu0 0.0
        %344 = vmatpush2.msra.mxu0 0.0
        %345 = vmatprep.subr.mxu0 0.0
        %346 = vmatpush2.msra.mxu0 0.0
        %347 = vmatprep.subr.mxu0 0.0
        %348 = vmatpush2.msra.mxu0 0.0
        %349 = vmatprep.subr.mxu0 0.0
        %350 = vmatpush2.msra.mxu0 0.0
        %351 = vmatprep.subr.mxu0 0.0
        %352 = vmatpush2.msra.mxu0 0.0
        %353 = vmatprep.subr.mxu0 0.0
        %354 = vmatpush2.msra.mxu0 0.0
        %355 = vmatprep.subr.mxu0 0.0
        %356 = vmatpush2.msra.mxu0 0.0
        %357 = vmatprep.subr.mxu0 0.0
        %358 = vmatpush2.msra.mxu0 0.0
        %359 = vmatprep.subr.mxu0 0.0
        %360 = vmatpush2.msra.mxu0 0.0
        %361 = vmatprep.subr.mxu0 0.0
        %362 = vmatpush2.msra.mxu0 0.0
        %363 = vmatprep.subr.mxu0 0.0
        %364 = vmatpush2.msra.mxu0 0.0
        %365 = vmatprep.subr.mxu0 0.0
        %366 = vmatpush2.msra.mxu0 0.0
        %367 = vmatprep.subr.mxu0 0.0
        %368 = vmatpush2.msra.mxu0 0.0
        %369 = vmatprep.subr.mxu0 0.0
        %370 = vmatpush2.msra.mxu0 0.0
        %371 = vmatprep.subr.mxu0 0.0
        %372 = vmatpush2.msra.mxu0 0.0
        %373 = vmatprep.subr.mxu0 0.0
        %374 = vmatpush2.msra.mxu0 0.0
        %375 = vmatprep.mubr.f32.mxu0 0.0
        %376 = vmatmul.mubr.f32.gmra.mxu0 %v309
        %v377 = vpop.f32.mrf.mxu0
        %v378 = vadd.f32 0.0, %v377
        %v379 = vpop.f32.mrf.mxu0
        %380 = vdwg.mxu0
        %v381 = vld [vmem:[%s272] sm:$0xff]
        %v382 = vld [vmem:[%s272 + $0x8] sm:$0xff]
        %v383 = vld [vmem:[#allocation5] sm:$0xff]
        %vm384 = vcmask 130048
        %v386 = vsel %vm384, %v383, 0
        %388 = vmatprep.subr.mxu0 0.0
        %389 = vmatpush1.msra.mxu0 0.0
        %390 = vmatprep.subr.mxu0 0.0
        %391 = vmatpush1.msra.mxu0 0.0
        %392 = vmatprep.subr.mxu0 0.0
        %393 = vmatpush1.msra.mxu0 0.0
        %394 = vmatprep.subr.mxu0 0.0
        %395 = vmatpush1.msra.mxu0 0.0
        %396 = vmatprep.subr.mxu0 0.0
        %397 = vmatpush1.msra.mxu0 0.0
        %398 = vmatprep.subr.mxu0 0.0
        %399 = vmatpush1.msra.mxu0 0.0
        %400 = vmatprep.subr.mxu0 0.0
        %401 = vmatpush1.msra.mxu0 0.0
        %402 = vmatprep.subr.mxu0 0.0
        %403 = vmatpush1.msra.mxu0 0.0
        %404 = vmatprep.subr.mxu0 0.0
        %405 = vmatpush1.msra.mxu0 0.0
        %406 = vmatprep.subr.mxu0 0.0
        %407 = vmatpush1.msra.mxu0 0.0
        %408 = vmatprep.subr.mxu0 0.0
        %409 = vmatpush1.msra.mxu0 0.0
        %410 = vmatprep.subr.mxu0 0.0
        %411 = vmatpush1.msra.mxu0 0.0
        %412 = vmatprep.subr.mxu0 0.0
        %413 = vmatpush1.msra.mxu0 0.0
        %414 = vmatprep.subr.mxu0 0.0
        %415 = vmatpush1.msra.mxu0 0.0
        %416 = vmatprep.subr.mxu0 0.0
        %417 = vmatpush1.msra.mxu0 %v382
        %418 = vmatprep.subr.mxu0 0.0
        %419 = vmatpush1.msra.mxu0 %v381
        %420 = vmatprep.subr.mxu0 0.0
        %421 = vmatpush2.msra.mxu0 0.0
        %422 = vmatprep.subr.mxu0 0.0
        %423 = vmatpush2.msra.mxu0 0.0
        %424 = vmatprep.subr.mxu0 0.0
        %425 = vmatpush2.msra.mxu0 0.0
        %426 = vmatprep.subr.mxu0 0.0
        %427 = vmatpush2.msra.mxu0 0.0
        %428 = vmatprep.subr.mxu0 0.0
        %429 = vmatpush2.msra.mxu0 0.0
        %430 = vmatprep.subr.mxu0 0.0
        %431 = vmatpush2.msra.mxu0 0.0
        %432 = vmatprep.subr.mxu0 0.0
        %433 = vmatpush2.msra.mxu0 0.0
        %434 = vmatprep.subr.mxu0 0.0
        %435 = vmatpush2.msra.mxu0 0.0
        %436 = vmatprep.subr.mxu0 0.0
        %437 = vmatpush2.msra.mxu0 0.0
        %438 = vmatprep.subr.mxu0 0.0
        %439 = vmatpush2.msra.mxu0 0.0
        %440 = vmatprep.subr.mxu0 0.0
        %441 = vmatpush2.msra.mxu0 0.0
        %442 = vmatprep.subr.mxu0 0.0
        %443 = vmatpush2.msra.mxu0 0.0
        %444 = vmatprep.subr.mxu0 0.0
        %445 = vmatpush2.msra.mxu0 0.0
        %446 = vmatprep.subr.mxu0 0.0
        %447 = vmatpush2.msra.mxu0 0.0
        %448 = vmatprep.subr.mxu0 0.0
        %449 = vmatpush2.msra.mxu0 0.0
        %450 = vmatprep.subr.mxu0 0.0
        %451 = vmatpush2.msra.mxu0 0.0
        %452 = vmatprep.mubr.f32.mxu0 0.0
        %453 = vmatmul.mubr.f32.gmra.mxu0 %v386
        %v454 = vpop.f32.mrf.mxu0
        %v455 = vadd.f32 0.0, %v454
        %v456 = vpop.f32.mrf.mxu0
        %457 = vdwg.mxu0
        %v458 = vmul.f32 %v378, %v455
        %v459 = vmul.f32 %v458, 0.0625
        %460 = vst [vmem:[%s301] sm:$0xff] %v459
        %s461 = sand.u32 %s146, 1
        %s462 = scalar_lea.sflag [#allocation4], %s461
        %s463 = sand.u32 %s146, 1
        %s464 = smul.addr %s463, 8
        %s465 = scalar_lea.vmem [#allocation9], %s464
        // Predicated region
        $region53: #{tpu_custom_call.1} parent=35 // pred_check
          %p466 = pneg %p156
        $region54: #{tpu_custom_call.1} parent=35 // pred_check_branch
          %468 = sbr.rel (%p466) target = $region56
        $region55: #{tpu_custom_call.1} parent=35 // pred_region
          %s470 = ssub.s32 128, 128
          %471 = vsyncadd %s462, %s470
          %s472 = smul.addr %s25, 2
          %s473 = sadd.s32 %s24, %s472
          %s474 = smul.addr %s473, 128
          %s475 = scalar_lea.hbm %s4, %s474
          %s477 = sshll.u32 %s465, 4
          %s478 = int_to_ptr.vmem [resolvable:$true] %s477
          %480 = dma.vmem_to_hbm [thread:$0]  %s478, 128, %s475, %s462
        $region56: #{tpu_custom_call.1} parent=35 // pred_fallthru
          _
      $region36: #{tpu_custom_call.1} parent=5 // pred_fallthru
        _
      %p481 = scmp.le.s32.totalorder 2, %s15
      // Predicated region
      $region57: #{tpu_custom_call.1} parent=5 // pred_check
        %p482 = pneg %p481
      $region58: #{tpu_custom_call.1} parent=5 // pred_check_branch
        %484 = sbr.rel (%p482) target = $region60
      $region59: #{tpu_custom_call.1} parent=5 // pred_region
        %s485 = ssub.s32 %s15, 2
        // Predicated region
        $region61: #{tpu_custom_call.1} parent=59 // pred_check
          %p486 = pneg %p162
        $region62: #{tpu_custom_call.1} parent=59 // pred_check_branch
          %488 = sbr.rel (%p486) target = $region64
        $region63: #{tpu_custom_call.1} parent=59 // pred_region
          %s489 = sand.u32 %s147, 1
          %s490 = scalar_lea.sflag [#allocation4], %s489
          %s491 = sand.u32 %s147, 1
          %s492 = smul.addr %s491, 8
          %s493 = scalar_lea.vmem [#allocation9], %s492
          %494 = dma.done %s490, 128
        $region64: #{tpu_custom_call.1} parent=59 // pred_fallthru
          _
      $region60: #{tpu_custom_call.1} parent=5 // pred_fallthru
        _
    $region6: #{tpu_custom_call.1} parent=1 // loop_footer
      %s19 = sadd.s32 1, %s15
    $region7: #{tpu_custom_call.1} parent=1 // loop_footer_branch
      %14 = sbr.rel target = $region3
    $region8: #{tpu_custom_call.1} parent=1 // loop_exit
      _
    %495 = vsyncpa [#allocation3], 1
    %s496 = scalar_lea.sflag [#allocation3], 1
    %497 = vsyncpa %s496, 1
    %498 = vsyncpa [#allocation6], 1
    %499 = vsyncpa [#allocation4], 1
    %s500 = scalar_lea.sflag [#allocation4], 1
    %501 = vsyncpa %s500, 1

</llo_original>
